<compile_context>
chip_gen: v5e
topology: v5e:2x2
jax: 0.10.0
libtpu: 0.0.40
codegen_flags: <defaults>
</compile_context>

<pallas_src>
import jax
import jax.numpy as jnp
from jax.experimental import pallas as pl
from jax.experimental.pallas import tpu as pltpu

H_SIZE = 32        # config.hidden_size
HIDDEN_DIM = 512   # AttentionHead hidden_dim
NUM_LAYERS = 5     # number of hidden_states produced by the (mock) transformer, >= 4


# ---------------------------------------------------------------------------
# Pallas kernel: batched AttentionHead + cls pooling + linear_out
# ---------------------------------------------------------------------------
def _clrp_head_kernel(feat_ref, ww_ref, wb_ref, vrow_ref, vb_ref,
                      wo_ref, wob_ref, out_ref):
    # feat_ref : (TB*S, 4H) bf16   -- TB batch elements, flattened over sequence
    # ww_ref   : (4H, 512)  bf16   -- AttentionHead.W weight
    # wb_ref   : (1, 512)   f32    -- AttentionHead.W bias
    # vrow_ref : (1, 512)   f32    -- AttentionHead.V weight as a lane-dense row
    # vb_ref   : (1,)       f32    -- AttentionHead.V bias (SMEM scalar)
    # wo_ref   : (1, 8H)    f32    -- linear_out weight as a lane-dense row
    # wob_ref  : (1,)       f32    -- linear_out bias (SMEM scalar)
    # out_ref  : (TB, 128)  f32    -- lane-dense output; wrapper keeps lane 0
    tb = out_ref.shape[0]
    ts, d4 = feat_ref.shape
    s = ts // tb

    feat_bf = feat_ref[...]                                        # (TB*S, 4H) bf16

    # AttentionHead.W : one big MXU matmul over all TB*S rows (bf16 in, f32 acc)
    att = jnp.tanh(
        jnp.dot(feat_bf, ww_ref[...], preferred_element_type=jnp.float32)
        + wb_ref[...])                                             # (TB*S, 512) f32

    # AttentionHead.V : N=1 matmul replaced by VPU multiply + lane reduce
    score = (jnp.sum(att * vrow_ref[...], axis=-1, keepdims=True)
             + vb_ref[0])                                          # (TB*S, 1) f32

    # softmax over the sequence axis, per batch element.
    # NOTE: reshapes below only regroup sublane tiles (last dim unchanged) and
    # are layout-trivial when S is a multiple of 8 (f32 sublane tile); demo S=8.
    score3 = score.reshape(tb, s, 1)                               # (TB, S, 1)
    m = jnp.max(score3, axis=1, keepdims=True)
    e = jnp.exp(score3 - m)
    denom = jnp.sum(e, axis=1, keepdims=True)
    attn_w = e * pl.reciprocal(denom, approx=True)                 # (TB, S, 1)

    # context vector + cls pooling (f32)
    feat3 = feat_bf.astype(jnp.float32).reshape(tb, s, d4)         # (TB, S, 4H)
    context = jnp.sum(attn_w * feat3, axis=1)                      # (TB, 4H)
    cls = feat3[:, 0, :]                                           # (TB, 4H)

    # linear_out: y = concat([context, cls]) @ Wo + b
    #           = context . Wo[:4H] + cls . Wo[4H:] + b   (VPU reduces, no MXU)
    wo_ctx = wo_ref[:, 0:d4]                                       # (1, 4H)
    wo_cls = wo_ref[:, d4:2 * d4]                                  # (1, 4H)
    y = (jnp.sum(context * wo_ctx, axis=-1, keepdims=True)
         + jnp.sum(cls * wo_cls, axis=-1, keepdims=True)
         + wob_ref[0])                                             # (TB, 1)

    # lane-dense store (128 wide, unmasked vst); wrapper slices lane 0
    out_ref[...] = jnp.broadcast_to(y, (tb, 128))


def clrp_head_forward(features, params, tile_b=None):
    """features: (B, S, 4H) float32/bfloat16 -> (B, 1) float32"""
    B, S, D4 = features.shape
    D8 = 2 * D4

    # Batch tile: whole batch in one step when small, otherwise 16 per step
    # (16*S rows per MXU call; 16 is sublane-tile aligned for the output block).
    if tile_b is None:
        tile_b = B if B <= 16 else 16
    grid_b = -(-B // tile_b)
    Bp = grid_b * tile_b

    feat = features.astype(jnp.bfloat16)
    if Bp != B:
        feat = jnp.pad(feat, ((0, Bp - B), (0, 0), (0, 0)))
    feat2d = feat.reshape(Bp * S, D4)                              # (Bp*S, 4H) bf16

    ww = params["W_w"].astype(jnp.bfloat16)                        # (4H, 512) bf16
    wb = params["W_b"].astype(jnp.float32)                         # (1, 512)
    vrow = params["V_w"].reshape(1, HIDDEN_DIM).astype(jnp.float32)    # (1, 512)
    vb = params["V_b"].reshape(1).astype(jnp.float32)                  # (1,)
    worow = params["out_w"].reshape(1, D8).astype(jnp.float32)         # (1, 8H)
    wob = params["out_b"].reshape(1).astype(jnp.float32)               # (1,)

    out = pl.pallas_call(
        _clrp_head_kernel,
        out_shape=jax.ShapeDtypeStruct((Bp, 128), jnp.float32),
        grid=(grid_b,),
        in_specs=[
            # batched features: TB*S rows per grid step
            pl.BlockSpec((tile_b * S, D4), lambda b: (b, 0)),
            # weights: constant index_maps -> kept resident, not re-DMA'd per step
            pl.BlockSpec((D4, HIDDEN_DIM), lambda b: (0, 0)),      # head.W weight
            pl.BlockSpec((1, HIDDEN_DIM), lambda b: (0, 0)),       # head.W bias
            pl.BlockSpec((1, HIDDEN_DIM), lambda b: (0, 0)),       # head.V row
            pl.BlockSpec(memory_space=pltpu.MemorySpace.SMEM),     # head.V bias
            pl.BlockSpec((1, D8), lambda b: (0, 0)),               # linear_out row
            pl.BlockSpec(memory_space=pltpu.MemorySpace.SMEM),     # linear_out bias
        ],
        out_specs=pl.BlockSpec((tile_b, 128), lambda b: (b, 0)),
        compiler_params=pltpu.CompilerParams(
            dimension_semantics=("parallel",)),
    )(feat2d, ww, wb, vrow, vb, worow, wob)
    return out[:B, :1]                                             # (B, 1)


# ---------------------------------------------------------------------------
# Glue (plain JAX): mock transformer + layer concatenation
# ---------------------------------------------------------------------------
def mock_transformer_hidden_states(input_ids, attention_mask, embed_table, num_layers):
    x = embed_table[input_ids] * attention_mask[..., None]          # (B, S, H)
    hs = [x]
    for i in range(1, num_layers):
        x = jnp.tanh(x * (1.0 + 0.1 * i) + 0.01 * i)
        hs.append(x)
    return jnp.stack(hs)                                            # (L, B, S, H)


def clrp_model_forward(input_ids, attention_mask, params):
    hs = mock_transformer_hidden_states(
        input_ids, attention_mask, params["embed"], NUM_LAYERS)
    # concat of the last 4 layers, emitted in bf16: halves the HBM round trip
    # that feeds the kernel (the kernel consumes bf16 features on the MXU).
    cat_over_last_layers = jnp.concatenate(
        [hs[-1], hs[-2], hs[-3], hs[-4]], axis=-1).astype(jnp.bfloat16)  # (B, S, 4H)
    return clrp_head_forward(cat_over_last_layers, params)          # (B, 1)


# ---------------------------------------------------------------------------
# Deterministic parameter init (matches nn.Linear shapes; weights are (in, out))
# ---------------------------------------------------------------------------
def init_params(key, h_size):
    d4, d8 = 4 * h_size, 8 * h_size
    ks = jax.random.split(key, 8)

    def linear(kw, kb, fan_in, fan_out):
        bound = 1.0 / float(fan_in) ** 0.5
        w = jax.random.uniform(kw, (fan_in, fan_out), jnp.float32, -bound, bound)
        b = jax.random.uniform(kb, (1, fan_out), jnp.float32, -bound, bound)
        return w, b

    W_w, W_b = linear(ks[0], ks[1], d4, HIDDEN_DIM)        # head.W : Linear(4H, 512)
    V_w, V_b = linear(ks[2], ks[3], HIDDEN_DIM, 1)         # head.V : Linear(512, 1)
    out_w, out_b = linear(ks[4], ks[5], d8, 1)             # linear_out : Linear(8H, 1)
    lin_w, lin_b = linear(ks[6], ks[7], 2 * h_size, 1)     # self.linear: unused in forward
    return {"W_w": W_w, "W_b": W_b, "V_w": V_w, "V_b": V_b,
            "out_w": out_w, "out_b": out_b,
            "lin_w": lin_w, "lin_b": lin_b}


# ---------------------------------------------------------------------------
# Pure-JAX reference for verification (mirrors the kernel's bf16 feature/W cast)
# ---------------------------------------------------------------------------
def reference_forward(input_ids, attention_mask, params):
    hs = mock_transformer_hidden_states(
        input_ids, attention_mask, params["embed"], NUM_LAYERS)
    feat = jnp.concatenate([hs[-1], hs[-2], hs[-3], hs[-4]],
                           axis=-1).astype(jnp.bfloat16)                # (B, S, 4H)
    att = jnp.tanh(
        jnp.dot(feat, params["W_w"].astype(jnp.bfloat16),
                preferred_element_type=jnp.float32) + params["W_b"])    # (B, S, 512)
    score = att @ params["V_w"] + params["V_b"]                         # (B, S, 1)
    w = jax.nn.softmax(score, axis=1)
    feat_f32 = feat.astype(jnp.float32)
    context = jnp.sum(w * feat_f32, axis=1)                             # (B, 4H)
    cls = feat_f32[:, 0]                                                # (B, 4H)
    combined = jnp.concatenate([context, cls], axis=-1)                 # (B, 8H)
    return combined @ params["out_w"] + params["out_b"]                 # (B, 1)


if __name__ == "__main__":
    key = jax.random.PRNGKey(0)
    k_params, k_embed, k_ids = jax.random.split(key, 3)

    B, S, VOCAB = 2, 8, 64
    params = init_params(k_params, H_SIZE)
    params["embed"] = jax.random.normal(k_embed, (VOCAB, H_SIZE), jnp.float32) * 0.02

    input_ids = jax.random.randint(k_ids, (B, S), 0, VOCAB)
    attention_mask = jnp.ones((B, S), jnp.float32)

    y = clrp_model_forward(input_ids, attention_mask, params)
    jax.block_until_ready(y)

    y_ref = reference_forward(input_ids, attention_mask, params)
    assert y.shape == (B, 1), y.shape
    # tolerance accounts for bf16 MXU inputs (mirrored in the reference) and the
    # EUP approximate reciprocal in the in-kernel softmax normalization.
    assert jnp.allclose(y, y_ref, atol=5e-3, rtol=5e-3), (y, y_ref)
    print("KERNEL_OK")
</pallas_src>

<mosaic_0001>
module attributes {stable_mosaic.version = 11 : i64} {
  func.func @_clrp_head_kernel(%arg0: i32, %arg1: memref<16x128xbf16, #tpu.memory_space<vmem>>, %arg2: memref<128x512xbf16, #tpu.memory_space<vmem>>, %arg3: memref<1x512xf32, #tpu.memory_space<vmem>>, %arg4: memref<1x512xf32, #tpu.memory_space<vmem>>, %arg5: memref<1xf32, #tpu.memory_space<smem>>, %arg6: memref<1x256xf32, #tpu.memory_space<vmem>>, %arg7: memref<1xf32, #tpu.memory_space<smem>>, %arg8: memref<2x128xf32, #tpu.memory_space<vmem>>) attributes {dimension_semantics = [#tpu.dimension_semantics<parallel>], iteration_bounds = array<i64: 1>, scalar_prefetch = 0 : i64, scratch_operands = 0 : i64, tpu.core_type = #tpu.core_type<tc>, window_params = [{transform_indices = @transform_0, window_bounds = array<i64: 16, 128>}, {pipeline_mode = #tpu.pipeline_mode<synchronous>, transform_indices = @transform_1, window_bounds = array<i64: 128, 512>}, {pipeline_mode = #tpu.pipeline_mode<synchronous>, transform_indices = @transform_2, window_bounds = array<i64: 1, 512>}, {pipeline_mode = #tpu.pipeline_mode<synchronous>, transform_indices = @transform_3, window_bounds = array<i64: 1, 512>}, {transform_indices = @transform_4, window_bounds = array<i64: 1>}, {pipeline_mode = #tpu.pipeline_mode<synchronous>, transform_indices = @transform_5, window_bounds = array<i64: 1, 256>}, {transform_indices = @transform_6, window_bounds = array<i64: 1>}, {transform_indices = @transform_7, window_bounds = array<i64: 2, 128>}]} {
    %c0 = arith.constant 0 : index
    %c0_0 = arith.constant 0 : index
    %0 = vector.load %arg1[%c0, %c0_0] : memref<16x128xbf16, #tpu.memory_space<vmem>>, vector<16x128xbf16>
    %c0_1 = arith.constant 0 : index
    %c0_2 = arith.constant 0 : index
    %1 = vector.load %arg2[%c0_1, %c0_2] : memref<128x512xbf16, #tpu.memory_space<vmem>>, vector<128x512xbf16>
    %cst = arith.constant dense<0.000000e+00> : vector<16x512xf32>
    %2 = tpu.matmul %0, %1, %cst {dimension_numbers = #tpu.dot_dimension_numbers<[1], [0], [0], [1], [0, 0, 1, 1], [], []>} : vector<16x128xbf16>, vector<128x512xbf16>, vector<16x512xf32> -> vector<16x512xf32>
    %c0_3 = arith.constant 0 : index
    %c0_4 = arith.constant 0 : index
    %3 = vector.load %arg3[%c0_3, %c0_4] : memref<1x512xf32, #tpu.memory_space<vmem>>, vector<1x512xf32>
    %4 = vector.broadcast %3 : vector<1x512xf32> to vector<16x512xf32>
    %5 = arith.addf %2, %4 : vector<16x512xf32>
    %6 = math.tanh %5 : vector<16x512xf32>
    %c0_5 = arith.constant 0 : index
    %c0_6 = arith.constant 0 : index
    %7 = vector.load %arg4[%c0_5, %c0_6] : memref<1x512xf32, #tpu.memory_space<vmem>>, vector<1x512xf32>
    %8 = vector.broadcast %7 : vector<1x512xf32> to vector<16x512xf32>
    %9 = arith.mulf %6, %8 : vector<16x512xf32>
    %cst_7 = arith.constant dense<0.000000e+00> : vector<16xf32>
    %10 = vector.multi_reduction <add>, %9, %cst_7 [1] : vector<16x512xf32> to vector<16xf32>
    %11 = vector.shape_cast %10 : vector<16xf32> to vector<16x1xf32>
    %c0_8 = arith.constant 0 : index
    %12 = memref.load %arg5[%c0_8] : memref<1xf32, #tpu.memory_space<smem>>
    %13 = vector.broadcast %12 : f32 to vector<16x1xf32>
    %14 = arith.addf %11, %13 : vector<16x1xf32>
    %15 = vector.shape_cast %14 : vector<16x1xf32> to vector<2x8x1xf32>
    %cst_9 = arith.constant dense<0xFF800000> : vector<2x1xf32>
    %16 = vector.multi_reduction <maximumf>, %15, %cst_9 [1] : vector<2x8x1xf32> to vector<2x1xf32>
    %17 = vector.shape_cast %16 : vector<2x1xf32> to vector<2x1x1xf32>
    %18 = vector.broadcast %17 : vector<2x1x1xf32> to vector<2x8x1xf32>
    %19 = arith.subf %15, %18 : vector<2x8x1xf32>
    %20 = math.exp %19 : vector<2x8x1xf32>
    %cst_10 = arith.constant dense<0.000000e+00> : vector<2x1xf32>
    %21 = vector.multi_reduction <add>, %20, %cst_10 [1] : vector<2x8x1xf32> to vector<2x1xf32>
    %22 = vector.shape_cast %21 : vector<2x1xf32> to vector<2x1x1xf32>
    %23 = tpu.reciprocal %22 {approx = true} : vector<2x1x1xf32> -> vector<2x1x1xf32>
    %24 = vector.broadcast %23 : vector<2x1x1xf32> to vector<2x8x1xf32>
    %25 = arith.mulf %20, %24 : vector<2x8x1xf32>
    %26 = arith.extf %0 : vector<16x128xbf16> to vector<16x128xf32>
    %27 = vector.shape_cast %26 : vector<16x128xf32> to vector<2x8x128xf32>
    %28 = vector.broadcast %25 : vector<2x8x1xf32> to vector<2x8x128xf32>
    %29 = arith.mulf %28, %27 : vector<2x8x128xf32>
    %cst_11 = arith.constant dense<0.000000e+00> : vector<2x128xf32>
    %30 = vector.multi_reduction <add>, %29, %cst_11 [1] : vector<2x8x128xf32> to vector<2x128xf32>
    %31 = vector.extract_strided_slice %27 {offsets = [0, 0, 0], sizes = [2, 1, 128], strides = [1, 1, 1]} : vector<2x8x128xf32> to vector<2x1x128xf32>
    %32 = vector.shape_cast %31 : vector<2x1x128xf32> to vector<2x128xf32>
    %c0_12 = arith.constant 0 : index
    %c0_13 = arith.constant 0 : index
    %33 = vector.load %arg6[%c0_12, %c0_13] : memref<1x256xf32, #tpu.memory_space<vmem>>, vector<1x128xf32>
    %c0_14 = arith.constant 0 : index
    %c128 = arith.constant 128 : index
    %34 = vector.load %arg6[%c0_14, %c128] : memref<1x256xf32, #tpu.memory_space<vmem>>, vector<1x128xf32>
    %35 = vector.broadcast %33 : vector<1x128xf32> to vector<2x128xf32>
    %36 = arith.mulf %30, %35 : vector<2x128xf32>
    %cst_15 = arith.constant dense<0.000000e+00> : vector<2xf32>
    %37 = vector.multi_reduction <add>, %36, %cst_15 [1] : vector<2x128xf32> to vector<2xf32>
    %38 = vector.shape_cast %37 : vector<2xf32> to vector<2x1xf32>
    %39 = vector.broadcast %34 : vector<1x128xf32> to vector<2x128xf32>
    %40 = arith.mulf %32, %39 : vector<2x128xf32>
    %cst_16 = arith.constant dense<0.000000e+00> : vector<2xf32>
    %41 = vector.multi_reduction <add>, %40, %cst_16 [1] : vector<2x128xf32> to vector<2xf32>
    %42 = vector.shape_cast %41 : vector<2xf32> to vector<2x1xf32>
    %43 = arith.addf %38, %42 : vector<2x1xf32>
    %c0_17 = arith.constant 0 : index
    %44 = memref.load %arg7[%c0_17] : memref<1xf32, #tpu.memory_space<smem>>
    %45 = vector.broadcast %44 : f32 to vector<2x1xf32>
    %46 = arith.addf %43, %45 : vector<2x1xf32>
    %47 = vector.shape_cast %46 : vector<2x1xf32> to vector<2x1xf32>
    %48 = vector.broadcast %47 : vector<2x1xf32> to vector<2x128xf32>
    %c0_18 = arith.constant 0 : index
    %c0_19 = arith.constant 0 : index
    %49 = vector.load %arg8[%c0_18, %c0_19] : memref<2x128xf32, #tpu.memory_space<vmem>>, vector<2x128xf32>
    tpu.vector_store %arg8[%c0_18, %c0_19], %48 {strides = array<i32>} : memref<2x128xf32, #tpu.memory_space<vmem>>, vector<2x128xf32>,
    return
  }
  func.func @transform_0(%arg0: i32) -> (i32, i32) {
    %c0_i32 = arith.constant 0 : i32
    %c0_i32_0 = arith.constant 0 : i32
    return %arg0, %c0_i32 : i32, i32
  }
  func.func @transform_1(%arg0: i32) -> (i32, i32) {
    %c0_i32 = arith.constant 0 : i32
    %c0_i32_0 = arith.constant 0 : i32
    %c0_i32_1 = arith.constant 0 : i32
    return %c0_i32, %c0_i32_0 : i32, i32
  }
  func.func @transform_2(%arg0: i32) -> (i32, i32) {
    %c0_i32 = arith.constant 0 : i32
    %c0_i32_0 = arith.constant 0 : i32
    %c0_i32_1 = arith.constant 0 : i32
    return %c0_i32, %c0_i32_0 : i32, i32
  }
  func.func @transform_3(%arg0: i32) -> (i32, i32) {
    %c0_i32 = arith.constant 0 : i32
    %c0_i32_0 = arith.constant 0 : i32
    %c0_i32_1 = arith.constant 0 : i32
    return %c0_i32, %c0_i32_0 : i32, i32
  }
  func.func @transform_4(%arg0: i32) -> i32 {
    %c0_i32 = arith.constant 0 : i32
    %c0_i32_0 = arith.constant 0 : i32
    return %c0_i32 : i32
  }
  func.func @transform_5(%arg0: i32) -> (i32, i32) {
    %c0_i32 = arith.constant 0 : i32
    %c0_i32_0 = arith.constant 0 : i32
    %c0_i32_1 = arith.constant 0 : i32
    return %c0_i32, %c0_i32_0 : i32, i32
  }
  func.func @transform_6(%arg0: i32) -> i32 {
    %c0_i32 = arith.constant 0 : i32
    %c0_i32_0 = arith.constant 0 : i32
    return %c0_i32 : i32
  }
  func.func @transform_7(%arg0: i32) -> (i32, i32) {
    %c0_i32 = arith.constant 0 : i32
    %c0_i32_0 = arith.constant 0 : i32
    return %arg0, %c0_i32 : i32, i32
  }
}

</mosaic_0001>

<llo_original>
// kernel: tpu_custom_call.1
$region0: #{tpu_custom_call.1}
  #allocation0 [shape = 'u32[]', space=smem, size = 0x4, offset = 0x4, fixed_abs, tag = 'smem constant byte address 0x4 - core index']
  #allocation1 [shape = 'u32[72,128]{1,0:T(1,128)}', space=vmem, size = 0x9000, scoped, tag = 'internal scratch']
  #allocation2 [shape = 'f32[1]{0:T(128)S(6)}', space=smem, size = 0x200, scoped, tag = 'scoped memory for tpu_custom_call.1']
  #allocation3 [shape = 'f32[1]{0:T(128)S(6)}', space=smem, size = 0x200, scoped, tag = 'scoped memory for tpu_custom_call.1']
  %s0 = inlined_call_operand.hbm [shape: bf16[16,128], index: 0, kind: input, shape index: {}]
  %s1 = inlined_call_operand.hbm [shape: bf16[128,512], index: 1, kind: input, shape index: {}]
  %s2 = inlined_call_operand.vmem [shape: f32[1,512], index: 2, kind: input, shape index: {}]
  %s3 = inlined_call_operand.hbm [shape: f32[1,512], index: 3, kind: input, shape index: {}]
  %s4 = inlined_call_operand.<no memory space> [shape: f32[1], index: 4, kind: input, shape index: {}]
  %s5 = inlined_call_operand.vmem [shape: f32[1,256], index: 5, kind: input, shape index: {}]
  %s6 = inlined_call_operand.<no memory space> [shape: f32[1], index: 6, kind: input, shape index: {}]
  %s7 = inlined_call_operand.hbm [shape: f32[2,128], index: 7, kind: output, shape index: {}]
  %s8 = sld [smem:[#allocation0]]
  $region50: #{tpu_custom_call.1} parent=0
    _
  %s10 = ssub.s32 1, %s8
  %s11 = scalar_select 0, %s10, %s8
  %12 = sst [smem:[#allocation2]] %s4
  %13 = sst [smem:[#allocation3]] %s6
  $region1: #{tpu_custom_call.1} parent=0
    #allocation4 [shape = 'u8[4096]{0}', space=vmem, size = 0x1000, scoped, tag = 'input window, operand 0, single buffered']
    #allocation5 [shape = 's32[1]{0}', space=sflag, size = 0x4, scoped, tag = 'scoped memory for tpu_custom_call.1']
    #allocation6 [shape = 's32[1]{0}', space=sflag, size = 0x4, scoped, tag = 'scoped memory for tpu_custom_call.1']
    #allocation7 [shape = 'u8[131072]{0}', space=vmem, size = 0x20000, scoped, tag = 'input window, operand 1, single buffered']
    #allocation8 [shape = 's32[1]{0}', space=sflag, size = 0x4, scoped, tag = 'scoped memory for tpu_custom_call.1']
    #allocation9 [shape = 'u8[2048]{0}', space=vmem, size = 0x800, scoped, tag = 'input window, operand 3, single buffered']
    #allocation10 [shape = 'u8[1024]{0}', space=vmem, size = 0x400, scoped, tag = 'output window, operand 0, single buffered']
    %14 = vsyncpa [#allocation5], 0
    %15 = vsyncpa [#allocation8], 0
    %16 = vsyncpa [#allocation6], 0
    // Predicated region
    $region2: #{tpu_custom_call.1} parent=1 // pred_check
      _
    $region3: #{tpu_custom_call.1} parent=1 // pred_check_branch
      %18 = sbr.rel (0) target = $region5
    $region4: #{tpu_custom_call.1} parent=1 // pred_region
      %20 = vsyncadd [#allocation5], 0
      %s21 = sshll.u32 %s0, 4
      %s22 = int_to_ptr.hbm [resolvable:$true] %s21
      %s23 = sshll.u32 [#allocation4], 4
      %s24 = int_to_ptr.vmem [resolvable:$true] %s23
      %29 = dma.hbm_to_vmem [thread:$0]  %s22, 128, %s24, [#allocation5], 64, 64, 4
    $region5: #{tpu_custom_call.1} parent=1 // pred_fallthru
      _
    // Predicated region
    $region6: #{tpu_custom_call.1} parent=1 // pred_check
      _
    $region7: #{tpu_custom_call.1} parent=1 // pred_check_branch
      %31 = sbr.rel (0) target = $region9
    $region8: #{tpu_custom_call.1} parent=1 // pred_region
      %33 = vsyncadd [#allocation8], 0
      %s34 = sshll.u32 %s1, 4
      %s35 = int_to_ptr.hbm [resolvable:$true] %s34
      %s36 = sshll.u32 [#allocation7], 4
      %s37 = int_to_ptr.vmem [resolvable:$true] %s36
      %42 = dma.hbm_to_vmem [thread:$0]  %s35, 4096, %s37, [#allocation8], 256, 256, 16
    $region9: #{tpu_custom_call.1} parent=1 // pred_fallthru
      _
    // Predicated region
    $region10: #{tpu_custom_call.1} parent=1 // pred_check
      _
    $region11: #{tpu_custom_call.1} parent=1 // pred_check_branch
      %44 = sbr.rel (0) target = $region13
    $region12: #{tpu_custom_call.1} parent=1 // pred_region
      _
    $region13: #{tpu_custom_call.1} parent=1 // pred_fallthru
      _
    // Predicated region
    $region14: #{tpu_custom_call.1} parent=1 // pred_check
      _
    $region15: #{tpu_custom_call.1} parent=1 // pred_check_branch
      %46 = sbr.rel (0) target = $region17
    $region16: #{tpu_custom_call.1} parent=1 // pred_region
      %48 = vsyncadd [#allocation8], 0
      %s50 = sshll.u32 %s3, 4
      %s51 = int_to_ptr.hbm [resolvable:$true] %s50
      %s52 = sshll.u32 [#allocation9], 4
      %s53 = int_to_ptr.vmem [resolvable:$true] %s52
      %55 = dma.hbm_to_vmem [thread:$0]  %s51, 64, %s53, [#allocation8]
    $region17: #{tpu_custom_call.1} parent=1 // pred_fallthru
      _
    // Predicated region
    $region18: #{tpu_custom_call.1} parent=1 // pred_check
      _
    $region19: #{tpu_custom_call.1} parent=1 // pred_check_branch
      %57 = sbr.rel (0) target = $region21
    $region20: #{tpu_custom_call.1} parent=1 // pred_region
      _
    $region21: #{tpu_custom_call.1} parent=1 // pred_fallthru
      _
    // Predicated region
    $region22: #{tpu_custom_call.1} parent=1 // pred_check
      _
    $region23: #{tpu_custom_call.1} parent=1 // pred_check_branch
      %59 = sbr.rel (0) target = $region25
    $region24: #{tpu_custom_call.1} parent=1 // pred_region
      _
    $region25: #{tpu_custom_call.1} parent=1 // pred_fallthru
      _
    // Predicated region
    $region26: #{tpu_custom_call.1} parent=1 // pred_check
      _
    $region27: #{tpu_custom_call.1} parent=1 // pred_check_branch
      %61 = sbr.rel (0) target = $region29
    $region28: #{tpu_custom_call.1} parent=1 // pred_region
      _
    $region29: #{tpu_custom_call.1} parent=1 // pred_fallthru
      _
    // Predicated region
    $region30: #{tpu_custom_call.1} parent=1 // pred_check
      _
    $region31: #{tpu_custom_call.1} parent=1 // pred_check_branch
      %63 = sbr.rel (0) target = $region33
    $region32: #{tpu_custom_call.1} parent=1 // pred_region
      %65 = dma.done [#allocation5], 128
    $region33: #{tpu_custom_call.1} parent=1 // pred_fallthru
      _
    // Predicated region
    $region34: #{tpu_custom_call.1} parent=1 // pred_check
      _
    $region35: #{tpu_custom_call.1} parent=1 // pred_check_branch
      %67 = sbr.rel (0) target = $region37
    $region36: #{tpu_custom_call.1} parent=1 // pred_region
      %69 = dma.done [#allocation8], 4096
    $region37: #{tpu_custom_call.1} parent=1 // pred_fallthru
      _
    // Predicated region
    $region38: #{tpu_custom_call.1} parent=1 // pred_check
      _
    $region39: #{tpu_custom_call.1} parent=1 // pred_check_branch
      %71 = sbr.rel (0) target = $region41
    $region40: #{tpu_custom_call.1} parent=1 // pred_region
      %73 = dma.done [#allocation8], 64
    $region41: #{tpu_custom_call.1} parent=1 // pred_fallthru
      _
    %v74 = vld [vmem:[#allocation4] sm:$0xf]
    %v75 = vld [vmem:[#allocation4 + $0x4] sm:$0xf]
    %v76 = vld [vmem:[#allocation7] sm:$0xff]
    %v77 = vld [vmem:[#allocation7 + $0x8] sm:$0xff]
    %v78 = vld [vmem:[#allocation7 + $0x10] sm:$0xff]
    %v79 = vld [vmem:[#allocation7 + $0x18] sm:$0xff]
    %v80 = vld [vmem:[#allocation7 + $0x20] sm:$0xff]
    %v81 = vld [vmem:[#allocation7 + $0x28] sm:$0xff]
    %v82 = vld [vmem:[#allocation7 + $0x30] sm:$0xff]
    %v83 = vld [vmem:[#allocation7 + $0x38] sm:$0xff]
    %v84 = vld [vmem:[#allocation7 + $0x40] sm:$0xff]
    %v85 = vld [vmem:[#allocation7 + $0x48] sm:$0xff]
    %v86 = vld [vmem:[#allocation7 + $0x50] sm:$0xff]
    %v87 = vld [vmem:[#allocation7 + $0x58] sm:$0xff]
    %v88 = vld [vmem:[#allocation7 + $0x60] sm:$0xff]
    %v89 = vld [vmem:[#allocation7 + $0x68] sm:$0xff]
    %v90 = vld [vmem:[#allocation7 + $0x70] sm:$0xff]
    %v91 = vld [vmem:[#allocation7 + $0x78] sm:$0xff]
    %v92 = vld [vmem:[#allocation7 + $0x80] sm:$0xff]
    %v93 = vld [vmem:[#allocation7 + $0x88] sm:$0xff]
    %v94 = vld [vmem:[#allocation7 + $0x90] sm:$0xff]
    %v95 = vld [vmem:[#allocation7 + $0x98] sm:$0xff]
    %v96 = vld [vmem:[#allocation7 + $0xa0] sm:$0xff]
    %v97 = vld [vmem:[#allocation7 + $0xa8] sm:$0xff]
    %v98 = vld [vmem:[#allocation7 + $0xb0] sm:$0xff]
    %v99 = vld [vmem:[#allocation7 + $0xb8] sm:$0xff]
    %v100 = vld [vmem:[#allocation7 + $0xc0] sm:$0xff]
    %v101 = vld [vmem:[#allocation7 + $0xc8] sm:$0xff]
    %v102 = vld [vmem:[#allocation7 + $0xd0] sm:$0xff]
    %v103 = vld [vmem:[#allocation7 + $0xd8] sm:$0xff]
    %v104 = vld [vmem:[#allocation7 + $0xe0] sm:$0xff]
    %v105 = vld [vmem:[#allocation7 + $0xe8] sm:$0xff]
    %v106 = vld [vmem:[#allocation7 + $0xf0] sm:$0xff]
    %v107 = vld [vmem:[#allocation7 + $0xf8] sm:$0xff]
    %v108 = vld [vmem:[%s2] sm:$0xf]
    %v110 = vperm.slane %v108, 0
    %v111 = vperm.slane %v108, 1
    %v112 = vperm.slane %v108, 2
    %v113 = vperm.slane %v108, 3
    %v120 = vunpack.c.l.b16 %v74
    %v121 = vunpack.c.l.b16 %v75
    %v122 = vpack.c.b16 %v121, %v120
    %v156 = vunpack.c.l.b16 %v76
    %v157 = vunpack.c.h.b16 %v76
    %v158 = vunpack.c.l.b16 %v77
    %v159 = vunpack.c.h.b16 %v77
    %v160 = vunpack.c.l.b16 %v78
    %v161 = vunpack.c.h.b16 %v78
    %v162 = vunpack.c.l.b16 %v79
    %v163 = vunpack.c.h.b16 %v79
    %v164 = vunpack.c.l.b16 %v80
    %v165 = vunpack.c.h.b16 %v80
    %v166 = vunpack.c.l.b16 %v81
    %v167 = vunpack.c.h.b16 %v81
    %v168 = vunpack.c.l.b16 %v82
    %v169 = vunpack.c.h.b16 %v82
    %v170 = vunpack.c.l.b16 %v83
    %v171 = vunpack.c.h.b16 %v83
    %v172 = vunpack.c.l.b16 %v84
    %v173 = vunpack.c.h.b16 %v84
    %v174 = vunpack.c.l.b16 %v85
    %v175 = vunpack.c.h.b16 %v85
    %v176 = vunpack.c.l.b16 %v86
    %v177 = vunpack.c.h.b16 %v86
    %v178 = vunpack.c.l.b16 %v87
    %v179 = vunpack.c.h.b16 %v87
    %v180 = vunpack.c.l.b16 %v88
    %v181 = vunpack.c.h.b16 %v88
    %v182 = vunpack.c.l.b16 %v89
    %v183 = vunpack.c.h.b16 %v89
    %v184 = vunpack.c.l.b16 %v90
    %v185 = vunpack.c.h.b16 %v90
    %v186 = vunpack.c.l.b16 %v91
    %v187 = vunpack.c.h.b16 %v91
    %v188 = vunpack.c.l.b16 %v92
    %v189 = vunpack.c.h.b16 %v92
    %v190 = vunpack.c.l.b16 %v93
    %v191 = vunpack.c.h.b16 %v93
    %v192 = vunpack.c.l.b16 %v94
    %v193 = vunpack.c.h.b16 %v94
    %v194 = vunpack.c.l.b16 %v95
    %v195 = vunpack.c.h.b16 %v95
    %v196 = vunpack.c.l.b16 %v96
    %v197 = vunpack.c.h.b16 %v96
    %v198 = vunpack.c.l.b16 %v97
    %v199 = vunpack.c.h.b16 %v97
    %v200 = vunpack.c.l.b16 %v98
    %v201 = vunpack.c.h.b16 %v98
    %v202 = vunpack.c.l.b16 %v99
    %v203 = vunpack.c.h.b16 %v99
    %v204 = vunpack.c.l.b16 %v100
    %v205 = vunpack.c.h.b16 %v100
    %v206 = vunpack.c.l.b16 %v101
    %v207 = vunpack.c.h.b16 %v101
    %v208 = vunpack.c.l.b16 %v102
    %v209 = vunpack.c.h.b16 %v102
    %v210 = vunpack.c.l.b16 %v103
    %v211 = vunpack.c.h.b16 %v103
    %v212 = vunpack.c.l.b16 %v104
    %v213 = vunpack.c.h.b16 %v104
    %v214 = vunpack.c.l.b16 %v105
    %v215 = vunpack.c.h.b16 %v105
    %v216 = vunpack.c.l.b16 %v106
    %v217 = vunpack.c.h.b16 %v106
    %v218 = vunpack.c.l.b16 %v107
    %v219 = vunpack.c.h.b16 %v107
    %v220 = vpack.c.b16 %v160, %v156
    %v221 = vpack.c.b16 %v161, %v157
    %v222 = vpack.c.b16 %v162, %v158
    %v223 = vpack.c.b16 %v163, %v159
    %v224 = vpack.c.b16 %v168, %v164
    %v225 = vpack.c.b16 %v169, %v165
    %v226 = vpack.c.b16 %v170, %v166
    %v227 = vpack.c.b16 %v171, %v167
    %v228 = vpack.c.b16 %v176, %v172
    %v229 = vpack.c.b16 %v177, %v173
    %v230 = vpack.c.b16 %v178, %v174
    %v231 = vpack.c.b16 %v179, %v175
    %v232 = vpack.c.b16 %v184, %v180
    %v233 = vpack.c.b16 %v185, %v181
    %v234 = vpack.c.b16 %v186, %v182
    %v235 = vpack.c.b16 %v187, %v183
    %v236 = vpack.c.b16 %v192, %v188
    %v237 = vpack.c.b16 %v193, %v189
    %v238 = vpack.c.b16 %v194, %v190
    %v239 = vpack.c.b16 %v195, %v191
    %v240 = vpack.c.b16 %v200, %v196
    %v241 = vpack.c.b16 %v201, %v197
    %v242 = vpack.c.b16 %v202, %v198
    %v243 = vpack.c.b16 %v203, %v199
    %v244 = vpack.c.b16 %v208, %v204
    %v245 = vpack.c.b16 %v209, %v205
    %v246 = vpack.c.b16 %v210, %v206
    %v247 = vpack.c.b16 %v211, %v207
    %v248 = vpack.c.b16 %v216, %v212
    %v249 = vpack.c.b16 %v217, %v213
    %v250 = vpack.c.b16 %v218, %v214
    %v251 = vpack.c.b16 %v219, %v215
    %284 = vmatpush.bf16.msra.mxu0 %v248
    %285 = vmatpush.bf16.msra.mxu0 %v244
    %286 = vmatpush.bf16.msra.mxu0 %v240
    %287 = vmatpush.bf16.msra.mxu0 %v236
    %288 = vmatpush.bf16.msra.mxu0 %v232
    %289 = vmatpush.bf16.msra.mxu0 %v228
    %290 = vmatpush.bf16.msra.mxu0 %v224
    %291 = vmatpush.bf16.msra.mxu0 %v220
    %292 = vmatmul.bf16.gmra.mxu0 %v122
    %v293 = vpop.f32.mrf.mxu0
    %v294 = vadd.f32 %v110, %v293
    %v295 = vpop.f32.mrf.mxu0
    %v296 = vadd.f32 %v110, %v295
    %297 = vdwg.mxu0
    %298 = vmatpush.bf16.msra.mxu0 %v249
    %299 = vmatpush.bf16.msra.mxu0 %v245
    %300 = vmatpush.bf16.msra.mxu0 %v241
    %301 = vmatpush.bf16.msra.mxu0 %v237
    %302 = vmatpush.bf16.msra.mxu0 %v233
    %303 = vmatpush.bf16.msra.mxu0 %v229
    %304 = vmatpush.bf16.msra.mxu0 %v225
    %305 = vmatpush.bf16.msra.mxu0 %v221
    %306 = vmatmul.bf16.gmra.mxu0 %v122
    %v307 = vpop.f32.mrf.mxu0
    %v308 = vadd.f32 %v111, %v307
    %v309 = vpop.f32.mrf.mxu0
    %v310 = vadd.f32 %v111, %v309
    %311 = vdwg.mxu0
    %312 = vmatpush.bf16.msra.mxu0 %v250
    %313 = vmatpush.bf16.msra.mxu0 %v246
    %314 = vmatpush.bf16.msra.mxu0 %v242
    %315 = vmatpush.bf16.msra.mxu0 %v238
    %316 = vmatpush.bf16.msra.mxu0 %v234
    %317 = vmatpush.bf16.msra.mxu0 %v230
    %318 = vmatpush.bf16.msra.mxu0 %v226
    %319 = vmatpush.bf16.msra.mxu0 %v222
    %320 = vmatmul.bf16.gmra.mxu0 %v122
    %v321 = vpop.f32.mrf.mxu0
    %v322 = vadd.f32 %v112, %v321
    %v323 = vpop.f32.mrf.mxu0
    %v324 = vadd.f32 %v112, %v323
    %325 = vdwg.mxu0
    %326 = vmatpush.bf16.msra.mxu0 %v251
    %327 = vmatpush.bf16.msra.mxu0 %v247
    %328 = vmatpush.bf16.msra.mxu0 %v243
    %329 = vmatpush.bf16.msra.mxu0 %v239
    %330 = vmatpush.bf16.msra.mxu0 %v235
    %331 = vmatpush.bf16.msra.mxu0 %v231
    %332 = vmatpush.bf16.msra.mxu0 %v227
    %333 = vmatpush.bf16.msra.mxu0 %v223
    %334 = vmatmul.bf16.gmra.mxu0 %v122
    %v335 = vpop.f32.mrf.mxu0
    %v336 = vadd.f32 %v113, %v335
    %v337 = vpop.f32.mrf.mxu0
    %v338 = vadd.f32 %v113, %v337
    %339 = vdwg.mxu0
    %v340 = vtanh.pop %v294
    %v341 = vtanh.pop %v308
    %v342 = vtanh.pop %v322
    %v343 = vtanh.pop %v336
    %v344 = vtanh.pop %v296
    %v345 = vtanh.pop %v310
    %v346 = vtanh.pop %v324
    %v347 = vtanh.pop %v338
    %v348 = vld [vmem:[#allocation9] sm:$0xf]
    %v350 = vperm.slane %v348, 0
    %v351 = vperm.slane %v348, 1
    %v352 = vperm.slane %v348, 2
    %v353 = vperm.slane %v348, 3
    %v358 = vmul.f32 %v340, %v350
    %v359 = vmul.f32 %v341, %v351
    %v360 = vmul.f32 %v342, %v352
    %v361 = vmul.f32 %v343, %v353
    %v362 = vmul.f32 %v344, %v350
    %v363 = vmul.f32 %v345, %v351
    %v364 = vmul.f32 %v346, %v352
    %v365 = vmul.f32 %v347, %v353
    %v366 = vadd.f32 %v358, %v359
    %v367 = vadd.f32 %v366, %v360
    %v368 = vadd.f32 %v367, %v361
    %369 = vadd.xlane.f32.xlu0 %v368
    %v370 = vpop.xlane.xlu0 %369
    %v371 = vadd.f32 %v362, %v363
    %v372 = vadd.f32 %v371, %v364
    %v373 = vadd.f32 %v372, %v365
    %374 = vadd.xlane.f32.xlu0 %v373
    %v375 = vpop.xlane.xlu0 %374
    %s376 = sld [smem:[#allocation2]]
    %v377 = vstv %s376
    %v378 = vadd.f32 %v370, %v377
    %v379 = vadd.f32 %v375, %v377
    %v380 = vrot.slane %v378, 4
    %v381 = vmax.f32 %v378, %v380
    %v382 = vrot.slane %v381, 2
    %v383 = vmax.f32 %v381, %v382
    %v384 = vrot.slane %v383, 1
    %v385 = vmax.f32 %v383, %v384
    %v386 = vrot.slane %v379, 4
    %v387 = vmax.f32 %v379, %v386
    %v388 = vrot.slane %v387, 2
    %v389 = vmax.f32 %v387, %v388
    %v390 = vrot.slane %v389, 1
    %v391 = vmax.f32 %v389, %v390
    %v392 = vsub.f32 %v378, %v385
    %v393 = vsub.f32 %v379, %v391
    %v394 = vmul.f32 %v392, 1.442695
    %v395 = vpow.pop %v394
    %v396 = vmul.f32 %v393, 1.442695
    %v397 = vpow.pop %v396
    %v398 = vrot.slane %v395, 4
    %v399 = vadd.f32 %v395, %v398
    %v400 = vrot.slane %v399, 2
    %v401 = vadd.f32 %v399, %v400
    %v402 = vrot.slane %v401, 1
    %v403 = vadd.f32 %v401, %v402
    %v404 = vrot.slane %v397, 4
    %v405 = vadd.f32 %v397, %v404
    %v406 = vrot.slane %v405, 2
    %v407 = vadd.f32 %v405, %v406
    %v408 = vrot.slane %v407, 1
    %v409 = vadd.f32 %v407, %v408
    %v410 = vrcp.pop %v403
    %v411 = vrcp.pop %v409
    %v412 = vmul.f32 %v395, %v410
    %v413 = vmul.f32 %v397, %v411
    %v414 = vunpack.c.l.bf16 %v74
    %v415 = vunpack.c.l.bf16 %v75
    %v416 = vmul.f32 %v412, %v414
    %v417 = vmul.f32 %v413, %v415
    %v418 = vrot.slane %v416, 4
    %v419 = vadd.f32 %v416, %v418
    %v420 = vrot.slane %v419, 2
    %v421 = vadd.f32 %v419, %v420
    %v422 = vrot.slane %v421, 1
    %v423 = vadd.f32 %v421, %v422
    %v424 = vrot.slane %v417, 4
    %v425 = vadd.f32 %v417, %v424
    %v426 = vrot.slane %v425, 2
    %v427 = vadd.f32 %v425, %v426
    %v428 = vrot.slane %v427, 1
    %v429 = vadd.f32 %v427, %v428
    %v430 = vld [vmem:[%s5] sm:$0x1]
    %v431 = vld [vmem:[%s5 + $0x1] sm:$0x1]
    %v433 = vperm.slane %v430, 0
    %v435 = vmul.f32 %v423, %v433
    %v436 = vmul.f32 %v429, %v433
    %v439 = vrot.slane %v436, 7
    %vm440 = vcmask 1041409
    %v441 = vsel %vm440, %v439, %v435
    %vm443 = vcmask 1041408
    %v444 = vsel %vm443, %v441, 0.0
    %445 = vadd.xlane.f32.xlu0 %v444
    %v446 = vpop.xlane.xlu0 %445
    %v448 = vperm.slane %v431, 0
    %v450 = vmul.f32 %v414, %v448
    %v451 = vmul.f32 %v415, %v448
    %v454 = vrot.slane %v451, 7
    %v455 = vsel %vm440, %v454, %v450
    %v457 = vsel %vm443, %v455, 0.0
    %458 = vadd.xlane.f32.xlu0 %v457
    %v459 = vpop.xlane.xlu0 %458
    %v460 = vadd.f32 %v446, %v459
    %s461 = sld [smem:[#allocation3]]
    %v462 = vstv %s461
    %v463 = vadd.f32 %v460, %v462
    %464 = vst [vmem:[#allocation10] sm:$0x3] %v463
    // Predicated region
    $region42: #{tpu_custom_call.1} parent=1 // pred_check
      _
    $region43: #{tpu_custom_call.1} parent=1 // pred_check_branch
      %466 = sbr.rel (0) target = $region45
    $region44: #{tpu_custom_call.1} parent=1 // pred_region
      %468 = vsyncadd [#allocation6], 0
      %s470 = sshll.u32 [#allocation10], 4
      %s471 = int_to_ptr.vmem [resolvable:$true] %s470
      %s472 = sshll.u32 %s7, 4
      %s473 = int_to_ptr.hbm [resolvable:$true] %s472
      %475 = dma.vmem_to_hbm [thread:$0]  %s471, 32, %s473, [#allocation6]
    $region45: #{tpu_custom_call.1} parent=1 // pred_fallthru
      _
    // Predicated region
    $region46: #{tpu_custom_call.1} parent=1 // pred_check
      _
    $region47: #{tpu_custom_call.1} parent=1 // pred_check_branch
      %477 = sbr.rel (0) target = $region49
    $region48: #{tpu_custom_call.1} parent=1 // pred_region
      %479 = dma.done [#allocation6], 32
    $region49: #{tpu_custom_call.1} parent=1 // pred_fallthru
      _
    %480 = vsyncpa [#allocation5], 1
    %481 = vsyncpa [#allocation8], 1
    %482 = vsyncpa [#allocation6], 1

</llo_original>
